<compile_context>
chip_gen: v6e
topology: v6e:2x2x1
jax: 0.10.0
libtpu: 0.0.40
codegen_flags: <defaults>
</compile_context>

<pallas_src>
import functools

import jax
import jax.numpy as jnp
from jax.experimental import pallas as pl
from jax.experimental.pallas import tpu as pltpu

HIDDEN = 256
NEG_SLOPE = 0.01  # nn.LeakyReLU() default negative_slope
LANES = 128
_VMEM_BUDGET = 20 * 1024 * 1024   # per-step working-set budget (fits every gen)
_VMEM_LIMIT = 32 * 1024 * 1024    # raise v5e's 16 MiB default; < v7x 64 MiB physical


def _round_up(n, m):
    return ((n + m - 1) // m) * m


def _cdiv(a, b):
    return (a + b - 1) // b


def _sublane(dtype):
    # sublane alignment for the second-minor dim of a block
    itemsize = jnp.dtype(dtype).itemsize
    return {4: 8, 2: 16, 1: 32}.get(itemsize, 8)


def _leaky_relu(v):
    return jnp.where(v >= 0, v, NEG_SLOPE * v)


def _vmem_step_bytes(block, in_size, out_size, x_sz, o_sz, w_sz):
    """Rough per-grid-step VMEM working set (double-buffered tiles + temps)."""
    x_tile = block * in_size * x_sz
    out_tile = block * _round_up(out_size, LANES) * o_sz   # lane-padded VMEM layout
    h_tmp = block * HIDDEN * 4                             # f32 hidden activations
    weights = ((in_size * HIDDEN + HIDDEN * out_size) * w_sz
               + (HIDDEN + out_size) * 4)
    return 2 * (x_tile + out_tile) + h_tmp + 2 * weights


def _mlp_kernel(x_ref, w1_ref, b1_ref, w2_ref, b2_ref, o_ref):
    # x_ref:  (block_b, in_size)    w1_ref: (in_size, 256)   b1_ref: (1, 256)
    # w2_ref: (256, out_size)       b2_ref: (1, out_size)    o_ref:  (block_b, out_size)
    x = x_ref[...]  # native dtype straight into the MXU

    h = jnp.dot(x, w1_ref[...], preferred_element_type=jnp.float32)
    h = _leaky_relu(h + b1_ref[...].astype(jnp.float32))        # f32 bias / activation

    # second matmul in the weights' native dtype; accumulate in f32
    y = jnp.dot(h.astype(w2_ref.dtype), w2_ref[...],
                preferred_element_type=jnp.float32)
    y = _leaky_relu(y + b2_ref[...].astype(jnp.float32))

    o_ref[...] = y.astype(o_ref.dtype)


@functools.partial(jax.jit, static_argnames=("block_b", "use_bf16"))
def prediction_network_forward(x, w1_t, b1, w2_t, b2, *, block_b=4096, use_bf16=False):
    """x: [B, inSize]; w1_t: [inSize, 256]; b1: [256]; w2_t: [256, outSize]; b2: [outSize].

    Weights are stored pre-transposed ([in, out]) so the kernel computes x @ W.
    Returns (y, None) to mirror the PyTorch module.
    """
    B, in_size = x.shape
    out_size = w2_t.shape[1]
    out_dtype = x.dtype

    if use_bf16:
        # halves dominant HBM input traffic; accumulation stays f32 in-kernel
        x = x.astype(jnp.bfloat16)
        w1_t = w1_t.astype(jnp.bfloat16)
        w2_t = w2_t.astype(jnp.bfloat16)

    x_sz = jnp.dtype(x.dtype).itemsize
    o_sz = jnp.dtype(out_dtype).itemsize
    w_sz = jnp.dtype(w1_t.dtype).itemsize

    # --- batch tile: big tiles (overhead-bound kernel), grid >= 2 where possible
    #     (v7x megacore), clamped by the VMEM budget. Ragged final block is
    #     handled by Pallas (masked boundary writes) — no padding / slicing.
    align = _sublane(x.dtype)
    block_eff = min(block_b, _round_up(_cdiv(B, 2), align))
    block_eff = max(block_eff, align)
    while (block_eff > align and
           _vmem_step_bytes(block_eff, in_size, out_size, x_sz, o_sz, w_sz)
           > _VMEM_BUDGET):
        block_eff = max(align, _round_up(block_eff // 2, align))

    grid = (_cdiv(B, block_eff),)

    b1_2d = b1.reshape(1, HIDDEN)
    b2_2d = b2.reshape(1, out_size)

    cost = pl.CostEstimate(
        flops=2 * B * (in_size * HIDDEN + HIDDEN * out_size),
        transcendentals=0,
        bytes_accessed=(B * in_size * x_sz
                        + in_size * HIDDEN * w_sz
                        + HIDDEN * out_size * w_sz
                        + (HIDDEN + out_size) * 4
                        + B * out_size * o_sz),
    )

    y = pl.pallas_call(
        _mlp_kernel,
        out_shape=jax.ShapeDtypeStruct((B, out_size), out_dtype),
        grid_spec=pltpu.PrefetchScalarGridSpec(
            num_scalar_prefetch=0,
            grid=grid,
            in_specs=[
                pl.BlockSpec((block_eff, in_size), lambda i: (i, 0)),  # x tile
                pl.BlockSpec((in_size, HIDDEN), lambda i: (0, 0)),     # W1^T (resident)
                pl.BlockSpec((1, HIDDEN), lambda i: (0, 0)),           # b1
                pl.BlockSpec((HIDDEN, out_size), lambda i: (0, 0)),    # W2^T (resident)
                pl.BlockSpec((1, out_size), lambda i: (0, 0)),         # b2
            ],
            out_specs=pl.BlockSpec((block_eff, out_size), lambda i: (i, 0)),
        ),
        compiler_params=pltpu.CompilerParams(
            dimension_semantics=("parallel",),
            vmem_limit_bytes=_VMEM_LIMIT,
        ),
        cost_estimate=cost,
    )(x, w1_t, b1_2d, w2_t, b2_2d)

    return (y, None)


def init_params(key, in_size, out_size):
    """Deterministic init mimicking nn.Linear's U(-1/sqrt(fan_in), 1/sqrt(fan_in))."""
    k1, k2, k3, k4 = jax.random.split(key, 4)
    bound1 = 1.0 / jnp.sqrt(in_size)
    bound2 = 1.0 / jnp.sqrt(HIDDEN)
    # stored already transposed: [in, out]
    w1_t = jax.random.uniform(k1, (in_size, HIDDEN), jnp.float32, -bound1, bound1)
    b1 = jax.random.uniform(k2, (HIDDEN,), jnp.float32, -bound1, bound1)
    w2_t = jax.random.uniform(k3, (HIDDEN, out_size), jnp.float32, -bound2, bound2)
    b2 = jax.random.uniform(k4, (out_size,), jnp.float32, -bound2, bound2)
    return w1_t, b1, w2_t, b2


def _reference(x, w1_t, b1, w2_t, b2):
    h = x @ w1_t + b1
    h = jnp.where(h >= 0, h, NEG_SLOPE * h)
    y = h @ w2_t + b2
    y = jnp.where(y >= 0, y, NEG_SLOPE * y)
    return y


if __name__ == "__main__":
    in_size, out_size, batch = 32, 16, 100   # batch not tile-aligned -> exercises ragged block

    key = jax.random.PRNGKey(0)
    kx, kp = jax.random.split(key)
    x = jax.random.normal(kx, (batch, in_size), jnp.float32)
    w1_t, b1, w2_t, b2 = init_params(kp, in_size, out_size)

    y, aux = prediction_network_forward(x, w1_t, b1, w2_t, b2)
    y = jax.block_until_ready(y)
    assert aux is None
    assert y.shape == (batch, out_size)
    y_ref = _reference(x, w1_t, b1, w2_t, b2)
    assert jnp.allclose(y, y_ref, atol=1e-5, rtol=1e-5), "mismatch vs reference"

    # larger, non-dividing batch: grid = 2 with a ragged final block, no padding pass
    x_big = jax.random.normal(kx, (5000, in_size), jnp.float32)
    y_big, _ = prediction_network_forward(x_big, w1_t, b1, w2_t, b2)
    y_big = jax.block_until_ready(y_big)
    assert jnp.allclose(y_big, _reference(x_big, w1_t, b1, w2_t, b2),
                        atol=1e-5, rtol=1e-5)

    # optional bf16 fast path (v5e-oriented): just exercise compilation / shapes
    y_bf, _ = prediction_network_forward(x, w1_t, b1, w2_t, b2, use_bf16=True)
    y_bf = jax.block_until_ready(y_bf)
    assert y_bf.shape == (batch, out_size)
    assert bool(jnp.all(jnp.isfinite(y_bf)))

    print("KERNEL_OK")
</pallas_src>

<mosaic_0001>
module attributes {stable_mosaic.version = 11 : i64} {
  func.func @_mlp_kernel(%arg0: i32, %arg1: memref<56x32xf32, #tpu.memory_space<vmem>>, %arg2: memref<32x256xf32, #tpu.memory_space<vmem>>, %arg3: memref<1x256xf32, #tpu.memory_space<vmem>>, %arg4: memref<256x16xf32, #tpu.memory_space<vmem>>, %arg5: memref<1x16xf32, #tpu.memory_space<vmem>>, %arg6: memref<56x16xf32, #tpu.memory_space<vmem>>) attributes {dimension_semantics = [#tpu.dimension_semantics<parallel>], iteration_bounds = array<i64: 2>, scalar_prefetch = 0 : i64, scratch_operands = 0 : i64, tpu.core_type = #tpu.core_type<tc>, window_params = [{transform_indices = @transform_0, window_bounds = array<i64: 56, 32>}, {pipeline_mode = #tpu.pipeline_mode<synchronous>, transform_indices = @transform_1, window_bounds = array<i64: 32, 256>}, {pipeline_mode = #tpu.pipeline_mode<synchronous>, transform_indices = @transform_2, window_bounds = array<i64: 1, 256>}, {pipeline_mode = #tpu.pipeline_mode<synchronous>, transform_indices = @transform_3, window_bounds = array<i64: 256, 16>}, {pipeline_mode = #tpu.pipeline_mode<synchronous>, transform_indices = @transform_4, window_bounds = array<i64: 1, 16>}, {transform_indices = @transform_5, window_bounds = array<i64: 56, 16>}]} {
    %c0 = arith.constant 0 : index
    %c0_0 = arith.constant 0 : index
    %0 = vector.load %arg1[%c0, %c0_0] : memref<56x32xf32, #tpu.memory_space<vmem>>, vector<56x32xf32>
    %c0_1 = arith.constant 0 : index
    %c0_2 = arith.constant 0 : index
    %1 = vector.load %arg2[%c0_1, %c0_2] : memref<32x256xf32, #tpu.memory_space<vmem>>, vector<32x256xf32>
    %cst = arith.constant dense<0.000000e+00> : vector<56x256xf32>
    %2 = tpu.matmul %0, %1, %cst {dimension_numbers = #tpu.dot_dimension_numbers<[1], [0], [0], [1], [0, 0, 1, 1], [], []>} : vector<56x32xf32>, vector<32x256xf32>, vector<56x256xf32> -> vector<56x256xf32>
    %c0_3 = arith.constant 0 : index
    %c0_4 = arith.constant 0 : index
    %3 = vector.load %arg3[%c0_3, %c0_4] : memref<1x256xf32, #tpu.memory_space<vmem>>, vector<1x256xf32>
    %4 = vector.broadcast %3 : vector<1x256xf32> to vector<56x256xf32>
    %5 = arith.addf %2, %4 : vector<56x256xf32>
    %cst_5 = arith.constant 0.000000e+00 : f32
    %6 = vector.broadcast %cst_5 : f32 to vector<56x256xf32>
    %7 = arith.cmpf oge, %5, %6 : vector<56x256xf32>
    %cst_6 = arith.constant 0.00999999977 : f32
    %8 = vector.broadcast %cst_6 : f32 to vector<56x256xf32>
    %9 = arith.mulf %8, %5 : vector<56x256xf32>
    %10 = arith.select %7, %5, %9 : vector<56x256xi1>, vector<56x256xf32>
    %c0_7 = arith.constant 0 : index
    %c0_8 = arith.constant 0 : index
    %11 = vector.load %arg4[%c0_7, %c0_8] : memref<256x16xf32, #tpu.memory_space<vmem>>, vector<256x16xf32>
    %cst_9 = arith.constant dense<0.000000e+00> : vector<56x16xf32>
    %12 = tpu.matmul %10, %11, %cst_9 {dimension_numbers = #tpu.dot_dimension_numbers<[1], [0], [0], [1], [0, 0, 1, 1], [], []>} : vector<56x256xf32>, vector<256x16xf32>, vector<56x16xf32> -> vector<56x16xf32>
    %c0_10 = arith.constant 0 : index
    %c0_11 = arith.constant 0 : index
    %13 = vector.load %arg5[%c0_10, %c0_11] : memref<1x16xf32, #tpu.memory_space<vmem>>, vector<1x16xf32>
    %14 = vector.broadcast %13 : vector<1x16xf32> to vector<56x16xf32>
    %15 = arith.addf %12, %14 : vector<56x16xf32>
    %cst_12 = arith.constant 0.000000e+00 : f32
    %16 = vector.broadcast %cst_12 : f32 to vector<56x16xf32>
    %17 = arith.cmpf oge, %15, %16 : vector<56x16xf32>
    %cst_13 = arith.constant 0.00999999977 : f32
    %18 = vector.broadcast %cst_13 : f32 to vector<56x16xf32>
    %19 = arith.mulf %18, %15 : vector<56x16xf32>
    %20 = arith.select %17, %15, %19 : vector<56x16xi1>, vector<56x16xf32>
    %c0_14 = arith.constant 0 : index
    %c0_15 = arith.constant 0 : index
    %21 = vector.load %arg6[%c0_14, %c0_15] : memref<56x16xf32, #tpu.memory_space<vmem>>, vector<56x16xf32>
    tpu.vector_store %arg6[%c0_14, %c0_15], %20 {strides = array<i32>} : memref<56x16xf32, #tpu.memory_space<vmem>>, vector<56x16xf32>,
    return
  }
  func.func @transform_0(%arg0: i32) -> (i32, i32) {
    %c0_i32 = arith.constant 0 : i32
    %c0_i32_0 = arith.constant 0 : i32
    return %arg0, %c0_i32 : i32, i32
  }
  func.func @transform_1(%arg0: i32) -> (i32, i32) {
    %c0_i32 = arith.constant 0 : i32
    %c0_i32_0 = arith.constant 0 : i32
    %c0_i32_1 = arith.constant 0 : i32
    return %c0_i32, %c0_i32_0 : i32, i32
  }
  func.func @transform_2(%arg0: i32) -> (i32, i32) {
    %c0_i32 = arith.constant 0 : i32
    %c0_i32_0 = arith.constant 0 : i32
    %c0_i32_1 = arith.constant 0 : i32
    return %c0_i32, %c0_i32_0 : i32, i32
  }
  func.func @transform_3(%arg0: i32) -> (i32, i32) {
    %c0_i32 = arith.constant 0 : i32
    %c0_i32_0 = arith.constant 0 : i32
    %c0_i32_1 = arith.constant 0 : i32
    return %c0_i32, %c0_i32_0 : i32, i32
  }
  func.func @transform_4(%arg0: i32) -> (i32, i32) {
    %c0_i32 = arith.constant 0 : i32
    %c0_i32_0 = arith.constant 0 : i32
    %c0_i32_1 = arith.constant 0 : i32
    return %c0_i32, %c0_i32_0 : i32, i32
  }
  func.func @transform_5(%arg0: i32) -> (i32, i32) {
    %c0_i32 = arith.constant 0 : i32
    %c0_i32_0 = arith.constant 0 : i32
    return %arg0, %c0_i32 : i32, i32
  }
}

</mosaic_0001>

<llo_original>
// kernel: prediction_network_forward.1
$region0: #{prediction_network_forward.1}
  #allocation0 [shape = 'u32[]', space=smem, size = 0x4, offset = 0x4, fixed_abs, tag = 'smem constant byte address 0x4 - core index']
  #allocation1 [shape = 'u32[144,128]{1,0:T(1,128)}', space=vmem, size = 0x12000, scoped, tag = 'internal scratch']
  %s0 = inlined_call_operand.vmem [shape: f32[100,32], index: 0, kind: input, shape index: {}]
  %s1 = inlined_call_operand.vmem [shape: f32[32,256], index: 1, kind: input, shape index: {}]
  %s2 = inlined_call_operand.vmem [shape: f32[1,256], index: 2, kind: input, shape index: {}]
  %s3 = inlined_call_operand.vmem [shape: f32[256,16], index: 3, kind: input, shape index: {}]
  %s4 = inlined_call_operand.vmem [shape: f32[1,16], index: 4, kind: input, shape index: {}]
  %s5 = inlined_call_operand.vmem [shape: f32[100,16], index: 5, kind: output, shape index: {}]
  %s6 = sld [smem:[#allocation0]]
  $region101: #{prediction_network_forward.1} parent=0
    _
  %s8 = ssub.s32 1, %s6
  %s9 = scalar_select 0, %s8, %s6
  $region1: #{prediction_network_forward.1} parent=0
    #allocation2 [shape = 'u8[57344]{0}', space=vmem, size = 0xe000, scoped, tag = 'output window, operand 0']
    loop: start=0, step=1, limit=4
    $region2: #{prediction_network_forward.1} parent=1 // loop_pre_header
      _
    $region3: #{prediction_network_forward.1} parent=1 // loop_header
      %s11 = sphi 0, %s15
      %p12 = scmp.ge.s32.totalorder %s11, 4
      %s21 = sphi 0, %s23
      %s24 = sphi 0, %s21
      %s25 = sphi 0, %s24
      %s41 = sphi 0, %s25
      %s45 = sphi 0, %s45
      %s47 = sphi 0, %s45
      %s48 = sphi 0, %s47
      %s62 = sphi 0, %s48
      %s66 = sphi 0, %s66
      %s68 = sphi 0, %s66
      %s69 = sphi 0, %s68
      %s83 = sphi 0, %s69
      %s87 = sphi 0, %s87
      %s89 = sphi 0, %s87
      %s90 = sphi 0, %s89
      %s104 = sphi 0, %s90
      %s108 = sphi 0, %s108
      %s110 = sphi 0, %s108
      %s111 = sphi 0, %s110
      %s125 = sphi 0, %s111
      %s131 = sphi 0, %s133
      %s134 = sphi 0, %s131
      %s135 = sphi 0, %s134
      %s151 = sphi 0, %s135
    $region4: #{prediction_network_forward.1} parent=1 // loop_header_branch
      %14 = sbr.rel (%p12) target = $region8
    $region5: #{prediction_network_forward.1} parent=1 // loop_body
      %s16 = ssub.s32 %s11, 1
      %s17 = ssub.s32 %s11, 2
      %s18 = sadd.s32 %s11, 1
      %s19 = ssub.s32 %s11, %s18
      %p20 = scmp.eq.s32.totalorder %s19, 0
      %s22 = sadd.s32 %s21, 1
      %s23 = scalar_select %p20, %s21, %s22
      %p26 = pneg %p20
      %p27 = scmp.eq.s32.totalorder %s11, 1
      %p28 = por %p26, %p27
      %p29 = scmp.ne.s32.totalorder %s21, %s24
      %p30 = scmp.eq.s32.totalorder %s11, 0
      %p31 = por %p29, %p30
      %p32 = scmp.ne.s32.totalorder %s21, %s24
      %p33 = scmp.eq.s32.totalorder %s16, 1
      %p34 = por %p32, %p33
      %p35 = scmp.ne.s32.totalorder %s24, %s25
      %p36 = scmp.eq.s32.totalorder %s16, 0
      %p37 = por %p35, %p36
      %p38 = scmp.ne.s32.totalorder %s24, %s25
      %p39 = scmp.eq.s32.totalorder %s17, 1
      %p40 = por %p38, %p39
      %p42 = scmp.ne.s32.totalorder %s25, %s41
      %p43 = scmp.eq.s32.totalorder %s17, 0
      %p44 = por %p42, %p43
      %s46 = sadd.s32 %s45, 1
      %p49 = scmp.eq.s32.totalorder %s11, 1
      %p50 = scmp.ne.s32.totalorder %s45, %s47
      %p51 = scmp.eq.s32.totalorder %s11, 0
      %p52 = por %p50, %p51
      %p53 = scmp.ne.s32.totalorder %s45, %s47
      %p54 = scmp.eq.s32.totalorder %s16, 1
      %p55 = por %p53, %p54
      %p56 = scmp.ne.s32.totalorder %s47, %s48
      %p57 = scmp.eq.s32.totalorder %s16, 0
      %p58 = por %p56, %p57
      %p59 = scmp.ne.s32.totalorder %s47, %s48
      %p60 = scmp.eq.s32.totalorder %s17, 1
      %p61 = por %p59, %p60
      %p63 = scmp.ne.s32.totalorder %s48, %s62
      %p64 = scmp.eq.s32.totalorder %s17, 0
      %p65 = por %p63, %p64
      %s67 = sadd.s32 %s66, 1
      %p70 = scmp.eq.s32.totalorder %s11, 1
      %p71 = scmp.ne.s32.totalorder %s66, %s68
      %p72 = scmp.eq.s32.totalorder %s11, 0
      %p73 = por %p71, %p72
      %p74 = scmp.ne.s32.totalorder %s66, %s68
      %p75 = scmp.eq.s32.totalorder %s16, 1
      %p76 = por %p74, %p75
      %p77 = scmp.ne.s32.totalorder %s68, %s69
      %p78 = scmp.eq.s32.totalorder %s16, 0
      %p79 = por %p77, %p78
      %p80 = scmp.ne.s32.totalorder %s68, %s69
      %p81 = scmp.eq.s32.totalorder %s17, 1
      %p82 = por %p80, %p81
      %p84 = scmp.ne.s32.totalorder %s69, %s83
      %p85 = scmp.eq.s32.totalorder %s17, 0
      %p86 = por %p84, %p85
      %s88 = sadd.s32 %s87, 1
      %p91 = scmp.eq.s32.totalorder %s11, 1
      %p92 = scmp.ne.s32.totalorder %s87, %s89
      %p93 = scmp.eq.s32.totalorder %s11, 0
      %p94 = por %p92, %p93
      %p95 = scmp.ne.s32.totalorder %s87, %s89
      %p96 = scmp.eq.s32.totalorder %s16, 1
      %p97 = por %p95, %p96
      %p98 = scmp.ne.s32.totalorder %s89, %s90
      %p99 = scmp.eq.s32.totalorder %s16, 0
      %p100 = por %p98, %p99
      %p101 = scmp.ne.s32.totalorder %s89, %s90
      %p102 = scmp.eq.s32.totalorder %s17, 1
      %p103 = por %p101, %p102
      %p105 = scmp.ne.s32.totalorder %s90, %s104
      %p106 = scmp.eq.s32.totalorder %s17, 0
      %p107 = por %p105, %p106
      %s109 = sadd.s32 %s108, 1
      %p112 = scmp.eq.s32.totalorder %s11, 1
      %p113 = scmp.ne.s32.totalorder %s108, %s110
      %p114 = scmp.eq.s32.totalorder %s11, 0
      %p115 = por %p113, %p114
      %p116 = scmp.ne.s32.totalorder %s108, %s110
      %p117 = scmp.eq.s32.totalorder %s16, 1
      %p118 = por %p116, %p117
      %p119 = scmp.ne.s32.totalorder %s110, %s111
      %p120 = scmp.eq.s32.totalorder %s16, 0
      %p121 = por %p119, %p120
      %p122 = scmp.ne.s32.totalorder %s110, %s111
      %p123 = scmp.eq.s32.totalorder %s17, 1
      %p124 = por %p122, %p123
      %p126 = scmp.ne.s32.totalorder %s111, %s125
      %p127 = scmp.eq.s32.totalorder %s17, 0
      %p128 = por %p126, %p127
      %s129 = ssub.s32 %s11, %s18
      %p130 = scmp.eq.s32.totalorder %s129, 0
      %s132 = sadd.s32 %s131, 1
      %s133 = scalar_select %p130, %s131, %s132
      %p136 = pneg %p130
      %p137 = scmp.eq.s32.totalorder %s11, 1
      %p138 = por %p136, %p137
      %p139 = scmp.ne.s32.totalorder %s131, %s134
      %p140 = scmp.eq.s32.totalorder %s11, 0
      %p141 = por %p139, %p140
      %p142 = scmp.ne.s32.totalorder %s131, %s134
      %p143 = scmp.eq.s32.totalorder %s16, 1
      %p144 = por %p142, %p143
      %p145 = scmp.ne.s32.totalorder %s134, %s135
      %p146 = scmp.eq.s32.totalorder %s16, 0
      %p147 = por %p145, %p146
      %p148 = scmp.ne.s32.totalorder %s134, %s135
      %p149 = scmp.eq.s32.totalorder %s17, 1
      %p150 = por %p148, %p149
      %p152 = scmp.ne.s32.totalorder %s135, %s151
      %p153 = scmp.eq.s32.totalorder %s17, 0
      %p154 = por %p152, %p153
      %p155 = scmp.le.s32.totalorder 1, %s11
      %p156 = scmp.lt.s32.totalorder %s11, 3
      %p157 = pnand %p155, %p156
      %p158 = pneg %p157
      // Predicated region
      $region9: #{prediction_network_forward.1} parent=5 // pred_check
        _
      $region10: #{prediction_network_forward.1} parent=5 // pred_check_branch
        %160 = sbr.rel (%p157) target = $region12
      $region11: #{prediction_network_forward.1} parent=5 // pred_region
        %s161 = ssub.s32 %s11, 1
        // Predicated region
        $region13: #{prediction_network_forward.1} parent=11 // pred_check
          %p162 = pneg %p58
        $region14: #{prediction_network_forward.1} parent=11 // pred_check_branch
          %164 = sbr.rel (%p162) target = $region16
        $region15: #{prediction_network_forward.1} parent=11 // pred_region
          _
        $region16: #{prediction_network_forward.1} parent=11 // pred_fallthru
          _
        // Predicated region
        $region17: #{prediction_network_forward.1} parent=11 // pred_check
          %p165 = pneg %p79
        $region18: #{prediction_network_forward.1} parent=11 // pred_check_branch
          %167 = sbr.rel (%p165) target = $region20
        $region19: #{prediction_network_forward.1} parent=11 // pred_region
          _
        $region20: #{prediction_network_forward.1} parent=11 // pred_fallthru
          _
        // Predicated region
        $region21: #{prediction_network_forward.1} parent=11 // pred_check
          %p168 = pneg %p100
        $region22: #{prediction_network_forward.1} parent=11 // pred_check_branch
          %170 = sbr.rel (%p168) target = $region24
        $region23: #{prediction_network_forward.1} parent=11 // pred_region
          _
        $region24: #{prediction_network_forward.1} parent=11 // pred_fallthru
          _
        // Predicated region
        $region25: #{prediction_network_forward.1} parent=11 // pred_check
          %p171 = pneg %p121
        $region26: #{prediction_network_forward.1} parent=11 // pred_check_branch
          %173 = sbr.rel (%p171) target = $region28
        $region27: #{prediction_network_forward.1} parent=11 // pred_region
          _
        $region28: #{prediction_network_forward.1} parent=11 // pred_fallthru
          _
      $region12: #{prediction_network_forward.1} parent=5 // pred_fallthru
        _
      %p174 = scmp.lt.s32.totalorder %s11, 2
      // Predicated region
      $region29: #{prediction_network_forward.1} parent=5 // pred_check
        %p175 = pneg %p174
      $region30: #{prediction_network_forward.1} parent=5 // pred_check_branch
        %177 = sbr.rel (%p175) target = $region32
      $region31: #{prediction_network_forward.1} parent=5 // pred_region
        // Predicated region
        $region33: #{prediction_network_forward.1} parent=31 // pred_check
          %p178 = pneg %p31
        $region34: #{prediction_network_forward.1} parent=31 // pred_check_branch
          %180 = sbr.rel (%p178) target = $region36
        $region35: #{prediction_network_forward.1} parent=31 // pred_region
          %s181 = smul.u32 7, %s11
          %s182 = ssub.s32 13, %s181
          %p183 = scmp.lt.s32.totalorder %s182, 7
          %s184 = scalar_select %p183, %s182, 7
          %s185 = smul.u32 128, %s184
          %p186 = scmp.lt.s32.totalorder %s181, 12
          %s187 = scalar_select %p186, %s181, 12
          %s188 = smul.addr %s187, 8
          %s189 = scalar_lea.vmem %s0, %s188
          %s190 = smul.u32 7, %s11
          %s191 = ssub.s32 13, %s190
          %p192 = scmp.lt.s32.totalorder %s191, 7
          %s193 = scalar_select %p192, %s191, 7
          %s194 = smul.u32 128, %s193
        $region36: #{prediction_network_forward.1} parent=31 // pred_fallthru
          _
      $region32: #{prediction_network_forward.1} parent=5 // pred_fallthru
        _
      %p195 = scmp.le.s32.totalorder 1, %s11
      %p196 = scmp.lt.s32.totalorder %s11, 3
      %p197 = pnand %p195, %p196
      %p198 = pneg %p197
      // Predicated region
      $region37: #{prediction_network_forward.1} parent=5 // pred_check
        _
      $region38: #{prediction_network_forward.1} parent=5 // pred_check_branch
        %200 = sbr.rel (%p197) target = $region40
      $region39: #{prediction_network_forward.1} parent=5 // pred_region
        %s201 = ssub.s32 %s11, 1
        %s202 = smul.u32 7, %s16
        %s203 = ssub.s32 13, %s202
        %p204 = scmp.lt.s32.totalorder %s203, 7
        %s205 = scalar_select %p204, %s203, 7
        %s206 = smul.u32 128, %s205
        %p207 = scmp.lt.s32.totalorder %s202, 12
        %s208 = scalar_select %p207, %s202, 12
        %s209 = smul.addr %s208, 8
        %s210 = scalar_lea.vmem %s0, %s209
        %p211 = pneg %p37
        %p212 = pneg %p34
        %p213 = pneg %p58
        %p214 = pneg %p55
        %p215 = pneg %p79
        %p216 = pneg %p76
        %p217 = pneg %p100
        %p218 = pneg %p97
        %p219 = pneg %p121
        %p220 = pneg %p118
        %p221 = pneg %p147
        %p222 = pneg %p144
        %s223 = sand.u32 %s134, 1
        %s224 = sand.u32 %s134, 1
        %s225 = smul.addr %s224, 56
        %s226 = scalar_lea.vmem [#allocation2], %s225
        %s227 = smul.u32 7, %s16
        %s228 = ssub.s32 13, %s227
        %p229 = scmp.lt.s32.totalorder %s228, 7
        %s230 = scalar_select %p229, %s228, 7
        %s231 = smul.u32 128, %s230
        %p232 = scmp.lt.s32.totalorder %s227, 12
        %s233 = scalar_select %p232, %s227, 12
        %s234 = smul.addr %s233, 8
        %s235 = scalar_lea.vmem %s0, %s234
        %s236 = smul.u32 7, %s16
        %s237 = ssub.s32 13, %s236
        %p238 = scmp.lt.s32.totalorder %s237, 7
        %s239 = scalar_select %p238, %s237, 7
        %s240 = smul.u32 128, %s239
        %s241 = smul.u32 7, %s16
        %s242 = ssub.s32 13, %s241
        %p243 = scmp.lt.s32.totalorder %s242, 7
        %s244 = scalar_select %p243, %s242, 7
        %s245 = smul.u32 128, %s244
        %v246 = vld [vmem:[%s235] sm:$0xff]
        %v247 = vld [vmem:[%s235 + $0x8] sm:$0xff]
        %v248 = vld [vmem:[%s235 + $0x10] sm:$0xff]
        %v249 = vld [vmem:[%s235 + $0x18] sm:$0xff]
        %v250 = vld [vmem:[%s235 + $0x20] sm:$0xff]
        %v251 = vld [vmem:[%s235 + $0x28] sm:$0xff]
        %v252 = vld [vmem:[%s235 + $0x30] sm:$0xff]
        %v253 = vld [vmem:[%s1] sm:$0xff]
        %v254 = vld [vmem:[%s1 + $0x8] sm:$0xff]
        %v255 = vld [vmem:[%s1 + $0x10] sm:$0xff]
        %v256 = vld [vmem:[%s1 + $0x18] sm:$0xff]
        %v257 = vld [vmem:[%s1 + $0x20] sm:$0xff]
        %v258 = vld [vmem:[%s1 + $0x28] sm:$0xff]
        %v259 = vld [vmem:[%s1 + $0x30] sm:$0xff]
        %v260 = vld [vmem:[%s1 + $0x38] sm:$0xff]
        %v261 = vld [vmem:[%s2] sm:$0x3]
        %v263 = vlaneseq
        %v264 = vshrl.u32 %v263, 7
        %v265 = vsub.s32 0, %v264
        %v266 = vrot.slane %v261, %v265
        %v267 = vlaneseq
        %v268 = vshrl.u32 %v267, 7
        %v269 = vsub.s32 1, %v268
        %v270 = vrot.slane %v261, %v269
        %vm273 = vcmask 261120
        %v275 = vsel %vm273, %v246, 0
        %v278 = vsel %vm273, %v247, 0
        %v281 = vsel %vm273, %v248, 0
        %v284 = vsel %vm273, %v249, 0
        %v287 = vsel %vm273, %v250, 0
        %v290 = vsel %vm273, %v251, 0
        %v293 = vsel %vm273, %v252, 0
        %295 = vmatprep.subr.mxu0 0.0
        %296 = vmatpush1.msra.mxu0 0.0
        %297 = vmatprep.subr.mxu0 0.0
        %298 = vmatpush1.msra.mxu0 0.0
        %299 = vmatprep.subr.mxu0 0.0
        %300 = vmatpush1.msra.mxu0 0.0
        %301 = vmatprep.subr.mxu0 0.0
        %302 = vmatpush1.msra.mxu0 0.0
        %303 = vmatprep.subr.mxu0 0.0
        %304 = vmatpush1.msra.mxu0 0.0
        %305 = vmatprep.subr.mxu0 0.0
        %306 = vmatpush1.msra.mxu0 0.0
        %307 = vmatprep.subr.mxu0 0.0
        %308 = vmatpush1.msra.mxu0 0.0
        %309 = vmatprep.subr.mxu0 0.0
        %310 = vmatpush1.msra.mxu0 0.0
        %311 = vmatprep.subr.mxu0 0.0
        %312 = vmatpush1.msra.mxu0 0.0
        %313 = vmatprep.subr.mxu0 0.0
        %314 = vmatpush1.msra.mxu0 0.0
        %315 = vmatprep.subr.mxu0 0.0
        %316 = vmatpush1.msra.mxu0 0.0
        %317 = vmatprep.subr.mxu0 0.0
        %318 = vmatpush1.msra.mxu0 0.0
        %319 = vmatprep.subr.mxu0 %v260
        %320 = vmatpush1.msra.mxu0 %v259
        %321 = vmatprep.subr.mxu0 %v258
        %322 = vmatpush1.msra.mxu0 %v257
        %323 = vmatprep.subr.mxu0 %v256
        %324 = vmatpush1.msra.mxu0 %v255
        %325 = vmatprep.subr.mxu0 %v254
        %326 = vmatpush1.msra.mxu0 %v253
        %327 = vmatprep.subr.mxu0 0.0
        %328 = vmatpush2.msra.mxu0 0.0
        %329 = vmatprep.subr.mxu0 0.0
        %330 = vmatpush2.msra.mxu0 0.0
        %331 = vmatprep.subr.mxu0 0.0
        %332 = vmatpush2.msra.mxu0 0.0
        %333 = vmatprep.subr.mxu0 0.0
        %334 = vmatpush2.msra.mxu0 0.0
        %335 = vmatprep.subr.mxu0 0.0
        %336 = vmatpush2.msra.mxu0 0.0
        %337 = vmatprep.subr.mxu0 0.0
        %338 = vmatpush2.msra.mxu0 0.0
        %339 = vmatprep.subr.mxu0 0.0
        %340 = vmatpush2.msra.mxu0 0.0
        %341 = vmatprep.subr.mxu0 0.0
        %342 = vmatpush2.msra.mxu0 0.0
        %343 = vmatprep.subr.mxu0 0.0
        %344 = vmatpush2.msra.mxu0 0.0
        %345 = vmatprep.subr.mxu0 0.0
        %346 = vmatpush2.msra.mxu0 0.0
        %347 = vmatprep.subr.mxu0 0.0
        %348 = vmatpush2.msra.mxu0 0.0
        %349 = vmatprep.subr.mxu0 0.0
        %350 = vmatpush2.msra.mxu0 0.0
        %351 = vmatprep.subr.mxu0 0.0
        %352 = vmatpush2.msra.mxu0 0.0
        %353 = vmatprep.subr.mxu0 0.0
        %354 = vmatpush2.msra.mxu0 0.0
        %355 = vmatprep.subr.mxu0 0.0
        %356 = vmatpush2.msra.mxu0 0.0
        %357 = vmatprep.subr.mxu0 0.0
        %358 = vmatpush2.msra.mxu0 0.0
        %359 = vmatprep.mubr.f32.mxu0 0.0
        %360 = vmatmul.mubr.f32.gmra.mxu0 %v275
        %v361 = vpop.f32.mrf.mxu0
        %v362 = vadd.f32 %v266, %v361
        %v363 = vpop.f32.mrf.mxu0
        %v364 = vadd.f32 %v270, %v363
        %365 = vmatprep.mubr.f32.mxu0 0.0
        %366 = vmatmul.mubr.f32.gmra.mxu0 %v278
        %v367 = vpop.f32.mrf.mxu0
        %v368 = vadd.f32 %v266, %v367
        %v369 = vpop.f32.mrf.mxu0
        %v370 = vadd.f32 %v270, %v369
        %371 = vmatprep.mubr.f32.mxu0 0.0
        %372 = vmatmul.mubr.f32.gmra.mxu0 %v281
        %v373 = vpop.f32.mrf.mxu0
        %v374 = vadd.f32 %v266, %v373
        %v375 = vpop.f32.mrf.mxu0
        %v376 = vadd.f32 %v270, %v375
        %377 = vmatprep.mubr.f32.mxu0 0.0
        %378 = vmatmul.mubr.f32.gmra.mxu0 %v284
        %v379 = vpop.f32.mrf.mxu0
        %v380 = vadd.f32 %v266, %v379
        %v381 = vpop.f32.mrf.mxu0
        %v382 = vadd.f32 %v270, %v381
        %383 = vmatprep.mubr.f32.mxu0 0.0
        %384 = vmatmul.mubr.f32.gmra.mxu0 %v287
        %v385 = vpop.f32.mrf.mxu0
        %v386 = vadd.f32 %v266, %v385
        %v387 = vpop.f32.mrf.mxu0
        %v388 = vadd.f32 %v270, %v387
        %389 = vmatprep.mubr.f32.mxu0 0.0
        %390 = vmatmul.mubr.f32.gmra.mxu0 %v290
        %v391 = vpop.f32.mrf.mxu0
        %v392 = vadd.f32 %v266, %v391
        %v393 = vpop.f32.mrf.mxu0
        %v394 = vadd.f32 %v270, %v393
        %395 = vmatprep.mubr.f32.mxu0 0.0
        %396 = vmatmul.mubr.f32.gmra.mxu0 %v293
        %v397 = vpop.f32.mrf.mxu0
        %v398 = vadd.f32 %v266, %v397
        %v399 = vpop.f32.mrf.mxu0
        %v400 = vadd.f32 %v270, %v399
        %401 = vdwg.mxu0
        %vm402 = vcmp.ge.f32.partialorder %v362, 0.0
        %vm403 = vcmp.ge.f32.partialorder %v364, 0.0
        %vm404 = vcmp.ge.f32.partialorder %v368, 0.0
        %vm405 = vcmp.ge.f32.partialorder %v370, 0.0
        %vm406 = vcmp.ge.f32.partialorder %v374, 0.0
        %vm407 = vcmp.ge.f32.partialorder %v376, 0.0
        %vm408 = vcmp.ge.f32.partialorder %v380, 0.0
        %vm409 = vcmp.ge.f32.partialorder %v382, 0.0
        %vm410 = vcmp.ge.f32.partialorder %v386, 0.0
        %vm411 = vcmp.ge.f32.partialorder %v388, 0.0
        %vm412 = vcmp.ge.f32.partialorder %v392, 0.0
        %vm413 = vcmp.ge.f32.partialorder %v394, 0.0
        %vm414 = vcmp.ge.f32.partialorder %v398, 0.0
        %vm415 = vcmp.ge.f32.partialorder %v400, 0.0
        %v416 = vmul.f32 %v362, 0.01
        %v417 = vmul.f32 %v364, 0.01
        %v418 = vmul.f32 %v368, 0.01
        %v419 = vmul.f32 %v370, 0.01
        %v420 = vmul.f32 %v374, 0.01
        %v421 = vmul.f32 %v376, 0.01
        %v422 = vmul.f32 %v380, 0.01
        %v423 = vmul.f32 %v382, 0.01
        %v424 = vmul.f32 %v386, 0.01
        %v425 = vmul.f32 %v388, 0.01
        %v426 = vmul.f32 %v392, 0.01
        %v427 = vmul.f32 %v394, 0.01
        %v428 = vmul.f32 %v398, 0.01
        %v429 = vmul.f32 %v400, 0.01
        %v430 = vsel %vm402, %v362, %v416
        %v431 = vsel %vm403, %v364, %v417
        %v432 = vsel %vm404, %v368, %v418
        %v433 = vsel %vm405, %v370, %v419
        %v434 = vsel %vm406, %v374, %v420
        %v435 = vsel %vm407, %v376, %v421
        %v436 = vsel %vm408, %v380, %v422
        %v437 = vsel %vm409, %v382, %v423
        %v438 = vsel %vm410, %v386, %v424
        %v439 = vsel %vm411, %v388, %v425
        %v440 = vsel %vm412, %v392, %v426
        %v441 = vsel %vm413, %v394, %v427
        %v442 = vsel %vm414, %v398, %v428
        %v443 = vsel %vm415, %v400, %v429
        %v444 = vld [vmem:[%s3] sm:$0xff]
        %v445 = vld [vmem:[%s3 + $0x8] sm:$0xff]
        %v446 = vld [vmem:[%s3 + $0x10] sm:$0xff]
        %v447 = vld [vmem:[%s3 + $0x18] sm:$0xff]
        %v448 = vld [vmem:[%s3 + $0x20] sm:$0xff]
        %v449 = vld [vmem:[%s3 + $0x28] sm:$0xff]
        %v450 = vld [vmem:[%s3 + $0x30] sm:$0xff]
        %v451 = vld [vmem:[%s3 + $0x38] sm:$0xff]
        %v452 = vld [vmem:[%s3 + $0x40] sm:$0xff]
        %v453 = vld [vmem:[%s3 + $0x48] sm:$0xff]
        %v454 = vld [vmem:[%s3 + $0x50] sm:$0xff]
        %v455 = vld [vmem:[%s3 + $0x58] sm:$0xff]
        %v456 = vld [vmem:[%s3 + $0x60] sm:$0xff]
        %v457 = vld [vmem:[%s3 + $0x68] sm:$0xff]
        %v458 = vld [vmem:[%s3 + $0x70] sm:$0xff]
        %v459 = vld [vmem:[%s3 + $0x78] sm:$0xff]
        %v460 = vld [vmem:[%s3 + $0x80] sm:$0xff]
        %v461 = vld [vmem:[%s3 + $0x88] sm:$0xff]
        %v462 = vld [vmem:[%s3 + $0x90] sm:$0xff]
        %v463 = vld [vmem:[%s3 + $0x98] sm:$0xff]
        %v464 = vld [vmem:[%s3 + $0xa0] sm:$0xff]
        %v465 = vld [vmem:[%s3 + $0xa8] sm:$0xff]
        %v466 = vld [vmem:[%s3 + $0xb0] sm:$0xff]
        %v467 = vld [vmem:[%s3 + $0xb8] sm:$0xff]
        %v468 = vld [vmem:[%s3 + $0xc0] sm:$0xff]
        %v469 = vld [vmem:[%s3 + $0xc8] sm:$0xff]
        %v470 = vld [vmem:[%s3 + $0xd0] sm:$0xff]
        %v471 = vld [vmem:[%s3 + $0xd8] sm:$0xff]
        %v472 = vld [vmem:[%s3 + $0xe0] sm:$0xff]
        %v473 = vld [vmem:[%s3 + $0xe8] sm:$0xff]
        %v474 = vld [vmem:[%s3 + $0xf0] sm:$0xff]
        %v475 = vld [vmem:[%s3 + $0xf8] sm:$0xff]
        %v476 = vld [vmem:[%s4] sm:$0x1]
        %v478 = vlaneseq
        %v479 = vshrl.u32 %v478, 7
        %v480 = vsub.s32 0, %v479
        %v481 = vrot.slane %v476, %v480
        %483 = vmatprep.subr.mxu0 0.0
        %484 = vmatpush1.msra.mxu0 %v459
        %485 = vmatprep.subr.mxu0 0.0
        %486 = vmatpush1.msra.mxu0 %v458
        %487 = vmatprep.subr.mxu0 0.0
        %488 = vmatpush1.msra.mxu0 %v457
        %489 = vmatprep.subr.mxu0 0.0
        %490 = vmatpush1.msra.mxu0 %v456
        %491 = vmatprep.subr.mxu0 0.0
        %492 = vmatpush1.msra.mxu0 %v455
        %493 = vmatprep.subr.mxu0 0.0
        %494 = vmatpush1.msra.mxu0 %v454
        %495 = vmatprep.subr.mxu0 0.0
        %496 = vmatpush1.msra.mxu0 %v453
        %497 = vmatprep.subr.mxu0 0.0
        %498 = vmatpush1.msra.mxu0 %v452
        %499 = vmatprep.subr.mxu0 0.0
        %500 = vmatpush1.msra.mxu0 %v451
        %501 = vmatprep.subr.mxu0 0.0
        %502 = vmatpush1.msra.mxu0 %v450
        %503 = vmatprep.subr.mxu0 0.0
        %504 = vmatpush1.msra.mxu0 %v449
        %505 = vmatprep.subr.mxu0 0.0
        %506 = vmatpush1.msra.mxu0 %v448
        %507 = vmatprep.subr.mxu0 0.0
        %508 = vmatpush1.msra.mxu0 %v447
        %509 = vmatprep.subr.mxu0 0.0
        %510 = vmatpush1.msra.mxu0 %v446
        %511 = vmatprep.subr.mxu0 0.0
        %512 = vmatpush1.msra.mxu0 %v445
        %513 = vmatprep.subr.mxu0 0.0
        %514 = vmatpush1.msra.mxu0 %v444
        %515 = vmatprep.subr.mxu0 0.0
        %516 = vmatpush2.msra.mxu0 %v475
        %517 = vmatprep.subr.mxu0 0.0
        %518 = vmatpush2.msra.mxu0 %v474
        %519 = vmatprep.subr.mxu0 0.0
        %520 = vmatpush2.msra.mxu0 %v473
        %521 = vmatprep.subr.mxu0 0.0
        %522 = vmatpush2.msra.mxu0 %v472
        %523 = vmatprep.subr.mxu0 0.0
        %524 = vmatpush2.msra.mxu0 %v471
        %525 = vmatprep.subr.mxu0 0.0
        %526 = vmatpush2.msra.mxu0 %v470
        %527 = vmatprep.subr.mxu0 0.0
        %528 = vmatpush2.msra.mxu0 %v469
        %529 = vmatprep.subr.mxu0 0.0
        %530 = vmatpush2.msra.mxu0 %v468
        %531 = vmatprep.subr.mxu0 0.0
        %532 = vmatpush2.msra.mxu0 %v467
        %533 = vmatprep.subr.mxu0 0.0
        %534 = vmatpush2.msra.mxu0 %v466
        %535 = vmatprep.subr.mxu0 0.0
        %536 = vmatpush2.msra.mxu0 %v465
        %537 = vmatprep.subr.mxu0 0.0
        %538 = vmatpush2.msra.mxu0 %v464
        %539 = vmatprep.subr.mxu0 0.0
        %540 = vmatpush2.msra.mxu0 %v463
        %541 = vmatprep.subr.mxu0 0.0
        %542 = vmatpush2.msra.mxu0 %v462
        %543 = vmatprep.subr.mxu0 0.0
        %544 = vmatpush2.msra.mxu0 %v461
        %545 = vmatprep.subr.mxu0 0.0
        %546 = vmatpush2.msra.mxu0 %v460
        %547 = vmatprep.mubr.f32.mxu0 %v431
        %548 = vmatmul.mubr.f32.gmra.mxu0 %v430
        %v549 = vpop.f32.mrf.mxu0
        %v550 = vadd.f32 %v481, %v549
        %v551 = vpop.f32.mrf.mxu0
        %552 = vmatprep.mubr.f32.mxu0 %v433
        %553 = vmatmul.mubr.f32.gmra.mxu0 %v432
        %v554 = vpop.f32.mrf.mxu0
        %v555 = vadd.f32 %v481, %v554
        %v556 = vpop.f32.mrf.mxu0
        %557 = vmatprep.mubr.f32.mxu0 %v435
        %558 = vmatmul.mubr.f32.gmra.mxu0 %v434
        %v559 = vpop.f32.mrf.mxu0
        %v560 = vadd.f32 %v481, %v559
        %v561 = vpop.f32.mrf.mxu0
        %562 = vmatprep.mubr.f32.mxu0 %v437
        %563 = vmatmul.mubr.f32.gmra.mxu0 %v436
        %v564 = vpop.f32.mrf.mxu0
        %v565 = vadd.f32 %v481, %v564
        %v566 = vpop.f32.mrf.mxu0
        %567 = vmatprep.mubr.f32.mxu0 %v439
        %568 = vmatmul.mubr.f32.gmra.mxu0 %v438
        %v569 = vpop.f32.mrf.mxu0
        %v570 = vadd.f32 %v481, %v569
        %v571 = vpop.f32.mrf.mxu0
        %572 = vmatprep.mubr.f32.mxu0 %v441
        %573 = vmatmul.mubr.f32.gmra.mxu0 %v440
        %v574 = vpop.f32.mrf.mxu0
        %v575 = vadd.f32 %v481, %v574
        %v576 = vpop.f32.mrf.mxu0
        %577 = vmatprep.mubr.f32.mxu0 %v443
        %578 = vmatmul.mubr.f32.gmra.mxu0 %v442
        %v579 = vpop.f32.mrf.mxu0
        %v580 = vadd.f32 %v481, %v579
        %v581 = vpop.f32.mrf.mxu0
        %582 = vdwg.mxu0
        %vm583 = vcmp.ge.f32.partialorder %v550, 0.0
        %vm584 = vcmp.ge.f32.partialorder %v555, 0.0
        %vm585 = vcmp.ge.f32.partialorder %v560, 0.0
        %vm586 = vcmp.ge.f32.partialorder %v565, 0.0
        %vm587 = vcmp.ge.f32.partialorder %v570, 0.0
        %vm588 = vcmp.ge.f32.partialorder %v575, 0.0
        %vm589 = vcmp.ge.f32.partialorder %v580, 0.0
        %v590 = vmul.f32 %v550, 0.01
        %v591 = vmul.f32 %v555, 0.01
        %v592 = vmul.f32 %v560, 0.01
        %v593 = vmul.f32 %v565, 0.01
        %v594 = vmul.f32 %v570, 0.01
        %v595 = vmul.f32 %v575, 0.01
        %v596 = vmul.f32 %v580, 0.01
        %v597 = vsel %vm583, %v550, %v590
        %v598 = vsel %vm584, %v555, %v591
        %v599 = vsel %vm585, %v560, %v592
        %v600 = vsel %vm586, %v565, %v593
        %v601 = vsel %vm587, %v570, %v594
        %v602 = vsel %vm588, %v575, %v595
        %v603 = vsel %vm589, %v580, %v596
        %vm604 = vcmask 130048
        %605 = vst.msk [vmem:[%s226] sm:$0xff] %vm604, %v597
        %606 = vst.msk [vmem:[%s226 + $0x8] sm:$0xff] %vm604, %v598
        %607 = vst.msk [vmem:[%s226 + $0x10] sm:$0xff] %vm604, %v599
        %608 = vst.msk [vmem:[%s226 + $0x18] sm:$0xff] %vm604, %v600
        %609 = vst.msk [vmem:[%s226 + $0x20] sm:$0xff] %vm604, %v601
        %610 = vst.msk [vmem:[%s226 + $0x28] sm:$0xff] %vm604, %v602
        %611 = vst.msk [vmem:[%s226 + $0x30] sm:$0xff] %vm604, %v603
        %s612 = sand.u32 %s134, 1
        %s613 = sand.u32 %s134, 1
        %s614 = smul.addr %s613, 56
        %s615 = scalar_lea.vmem [#allocation2], %s614
        // Predicated region
        $region41: #{prediction_network_forward.1} parent=39 // pred_check
          %p616 = pneg %p144
        $region42: #{prediction_network_forward.1} parent=39 // pred_check_branch
          %618 = sbr.rel (%p616) target = $region44
        $region43: #{prediction_network_forward.1} parent=39 // pred_region
          %s619 = smul.u32 7, %s16
          %s620 = ssub.s32 13, %s619
          %p621 = scmp.lt.s32.totalorder %s620, 7
          %s622 = scalar_select %p621, %s620, 7
          %s623 = smul.u32 128, %s622
          %p624 = scmp.ne.s32.totalorder 0, %s623
          %s625 = smul.addr %s619, 8
          %s626 = scalar_lea.vmem %s5, %s625
          // Predicated region
          $region45: #{prediction_network_forward.1} parent=43 // pred_check
            %p627 = pneg %p624
          $region46: #{prediction_network_forward.1} parent=43 // pred_check_branch
            %629 = sbr.rel (%p627) target = $region48
          $region47: #{prediction_network_forward.1} parent=43 // pred_region
            // Predicated region
            $region49: #{prediction_network_forward.1} parent=47 // pred_check
              _
            $region50: #{prediction_network_forward.1} parent=47 // pred_check_branch
              %631 = sbr.rel (0) target = $region52
            $region51: #{prediction_network_forward.1} parent=47 // pred_region
              // Predicated region
              $region71: #{prediction_network_forward.1} parent=51 // pred_check
                _
              $region72: #{prediction_network_forward.1} parent=51 // pred_check_branch
                %694 = sbr.rel (0) target = $region74
              $region73: #{prediction_network_forward.1} parent=51 // pred_region
                %s695 = sdiv.u32.pop %s622, 7
                %s696 = srem.u32.pop %s622, 7
                // While loop
                $region75: #{prediction_network_forward.1} parent=73 // loop_pre_header
                  _
                $region76: #{prediction_network_forward.1} parent=73 // loop_header
                  %s698 = sphi 0, %s700
                  %p699 = scmp.ge.s32.totalorder %s698, %s695
                  %s703 = sphi 0, %s722
                  %s704 = sphi %s615, %s725
                  %s705 = sphi %s626, %s726
                $region77: #{prediction_network_forward.1} parent=73 // loop_header_branch
                  %702 = sbr.rel (%p699) target = $region81
                $region78: #{prediction_network_forward.1} parent=73 // loop_body
                  %v706 = vld [vmem:[%s704] sm:$0xff]
                  %707 = vst [vmem:[%s705] sm:$0xff] %v706
                  %v708 = vld [vmem:[%s704 + $0x8] sm:$0xff]
                  %709 = vst [vmem:[%s705 + $0x8] sm:$0xff] %v708
                  %v710 = vld [vmem:[%s704 + $0x10] sm:$0xff]
                  %711 = vst [vmem:[%s705 + $0x10] sm:$0xff] %v710
                  %v712 = vld [vmem:[%s704 + $0x18] sm:$0xff]
                  %713 = vst [vmem:[%s705 + $0x18] sm:$0xff] %v712
                  %v714 = vld [vmem:[%s704 + $0x20] sm:$0xff]
                  %715 = vst [vmem:[%s705 + $0x20] sm:$0xff] %v714
                  %v716 = vld [vmem:[%s704 + $0x28] sm:$0xff]
                  %717 = vst [vmem:[%s705 + $0x28] sm:$0xff] %v716
                  %v718 = vld [vmem:[%s704 + $0x30] sm:$0xff]
                  %719 = vst [vmem:[%s705 + $0x30] sm:$0xff] %v718
                  %s720 = sadd.s32 1, %s703
                  %p721 = scmp.ge.s32.totalorder %s720, %s695
                  %s722 = scalar_select %p721, 0, %s720
                  %s723 = smul.u32 %s722, 56
                  %s724 = smul.u32 %s722, 56
                  %s725 = scalar_lea.vmem %s615, %s723 [#allocation2]
                  %s726 = scalar_lea.vmem %s626, %s724
                $region79: #{prediction_network_forward.1} parent=73 // loop_footer
                  %s700 = sadd.s32 %s698, 1
                $region80: #{prediction_network_forward.1} parent=73 // loop_footer_branch
                  %697 = sbr.rel target = $region76
                $region81: #{prediction_network_forward.1} parent=73 // loop_exit
                  _
                %s727 = sdiv.u32.pop %s622, 7
                %s728 = srem.u32.pop %s622, 7
                %s729 = smul.u32 %s727, 7
                %s730 = smul.u32 8, %s729
                %s731 = scalar_lea.vmem %s615, %s730 [#allocation2]
                %s732 = smul.u32 8, %s729
                %s733 = scalar_lea.vmem %s626, %s732
                // While loop
                $region82: #{prediction_network_forward.1} parent=73 // loop_pre_header
                  _
                $region83: #{prediction_network_forward.1} parent=73 // loop_header
                  %s735 = sphi 0, %s737
                  %p736 = scmp.ge.s32.totalorder %s735, %s728
                  %s740 = sphi 0, %s747
                  %s741 = sphi %s731, %s750
                  %s742 = sphi %s733, %s751
                $region84: #{prediction_network_forward.1} parent=73 // loop_header_branch
                  %739 = sbr.rel (%p736) target = $region88
                $region85: #{prediction_network_forward.1} parent=73 // loop_body
                  %v743 = vld [vmem:[%s741] sm:$0xff]
                  %744 = vst [vmem:[%s742] sm:$0xff] %v743
                  %s745 = sadd.s32 1, %s740
                  %p746 = scmp.ge.s32.totalorder %s745, %s728
                  %s747 = scalar_select %p746, 0, %s745
                  %s748 = smul.u32 %s747, 8
                  %s749 = smul.u32 %s747, 8
                  %s750 = scalar_lea.vmem %s731, %s748 [#allocation2]
                  %s751 = scalar_lea.vmem %s733, %s749
                $region86: #{prediction_network_forward.1} parent=73 // loop_footer
                  %s737 = sadd.s32 %s735, 1
                $region87: #{prediction_network_forward.1} parent=73 // loop_footer_branch
                  %734 = sbr.rel target = $region83
                $region88: #{prediction_network_forward.1} parent=73 // loop_exit
                  _
              $region74: #{prediction_network_forward.1} parent=51 // pred_fallthru
                _
              // Predicated region
              $region89: #{prediction_network_forward.1} parent=51 // pred_check
                _
              $region90: #{prediction_network_forward.1} parent=51 // pred_check_branch
                %753 = sbr.rel target = $region92
              $region91: #{prediction_network_forward.1} parent=51 // pred_region
                _
              $region92: #{prediction_network_forward.1} parent=51 // pred_fallthru
                _
            $region52: #{prediction_network_forward.1} parent=47 // pred_fallthru
              _
            // Predicated region
            $region53: #{prediction_network_forward.1} parent=47 // pred_check
              _
            $region54: #{prediction_network_forward.1} parent=47 // pred_check_branch
              %633 = sbr.rel target = $region56
            $region55: #{prediction_network_forward.1} parent=47 // pred_region
              %s635 = ssub.s32 256, 1
              %s636 = sdiv.u32.pop %s622, 7
              %s637 = srem.u32.pop %s622, 7
              // While loop
              $region57: #{prediction_network_forward.1} parent=55 // loop_pre_header
                _
              $region58: #{prediction_network_forward.1} parent=55 // loop_header
                %s639 = sphi 0, %s641
                %p640 = scmp.ge.s32.totalorder %s639, %s636
                %s644 = sphi 0, %s663
                %s645 = sphi %s615, %s666
                %s646 = sphi %s626, %s667
              $region59: #{prediction_network_forward.1} parent=55 // loop_header_branch
                %643 = sbr.rel (%p640) target = $region63
              $region60: #{prediction_network_forward.1} parent=55 // loop_body
                %v647 = vld [vmem:[%s645] sm:%s635]
                %648 = vst [vmem:[%s646] sm:%s635] %v647
                %v649 = vld [vmem:[%s645 + $0x8] sm:%s635]
                %650 = vst [vmem:[%s646 + $0x8] sm:%s635] %v649
                %v651 = vld [vmem:[%s645 + $0x10] sm:%s635]
                %652 = vst [vmem:[%s646 + $0x10] sm:%s635] %v651
                %v653 = vld [vmem:[%s645 + $0x18] sm:%s635]
                %654 = vst [vmem:[%s646 + $0x18] sm:%s635] %v653
                %v655 = vld [vmem:[%s645 + $0x20] sm:%s635]
                %656 = vst [vmem:[%s646 + $0x20] sm:%s635] %v655
                %v657 = vld [vmem:[%s645 + $0x28] sm:%s635]
                %658 = vst [vmem:[%s646 + $0x28] sm:%s635] %v657
                %v659 = vld [vmem:[%s645 + $0x30] sm:%s635]
                %660 = vst [vmem:[%s646 + $0x30] sm:%s635] %v659
                %s661 = sadd.s32 1, %s644
                %p662 = scmp.ge.s32.totalorder %s661, %s636
                %s663 = scalar_select %p662, 0, %s661
                %s664 = smul.u32 %s663, 56
                %s665 = smul.u32 %s663, 56
                %s666 = scalar_lea.vmem %s615, %s664 [#allocation2]
                %s667 = scalar_lea.vmem %s626, %s665
              $region61: #{prediction_network_forward.1} parent=55 // loop_footer
                %s641 = sadd.s32 %s639, 1
              $region62: #{prediction_network_forward.1} parent=55 // loop_footer_branch
                %638 = sbr.rel target = $region58
              $region63: #{prediction_network_forward.1} parent=55 // loop_exit
                _
              %s668 = sdiv.u32.pop %s622, 7
              %s669 = srem.u32.pop %s622, 7
              %s670 = smul.u32 %s668, 7
              %s671 = smul.u32 8, %s670
              %s672 = scalar_lea.vmem %s615, %s671 [#allocation2]
              %s673 = smul.u32 8, %s670
              %s674 = scalar_lea.vmem %s626, %s673
              // While loop
              $region64: #{prediction_network_forward.1} parent=55 // loop_pre_header
                _
              $region65: #{prediction_network_forward.1} parent=55 // loop_header
                %s676 = sphi 0, %s678
                %p677 = scmp.ge.s32.totalorder %s676, %s669
                %s681 = sphi 0, %s688
                %s682 = sphi %s672, %s691
                %s683 = sphi %s674, %s692
              $region66: #{prediction_network_forward.1} parent=55 // loop_header_branch
                %680 = sbr.rel (%p677) target = $region70
              $region67: #{prediction_network_forward.1} parent=55 // loop_body
                %v684 = vld [vmem:[%s682] sm:%s635]
                %685 = vst [vmem:[%s683] sm:%s635] %v684
                %s686 = sadd.s32 1, %s681
                %p687 = scmp.ge.s32.totalorder %s686, %s669
                %s688 = scalar_select %p687, 0, %s686
                %s689 = smul.u32 %s688, 8
                %s690 = smul.u32 %s688, 8
                %s691 = scalar_lea.vmem %s672, %s689 [#allocation2]
                %s692 = scalar_lea.vmem %s674, %s690
              $region68: #{prediction_network_forward.1} parent=55 // loop_footer
                %s678 = sadd.s32 %s676, 1
              $region69: #{prediction_network_forward.1} parent=55 // loop_footer_branch
                %675 = sbr.rel target = $region65
              $region70: #{prediction_network_forward.1} parent=55 // loop_exit
                _
            $region56: #{prediction_network_forward.1} parent=47 // pred_fallthru
              _
          $region48: #{prediction_network_forward.1} parent=43 // pred_fallthru
            _
          %754 = vnop
        $region44: #{prediction_network_forward.1} parent=39 // pred_fallthru
          _
      $region40: #{prediction_network_forward.1} parent=5 // pred_fallthru
        _
      %p755 = scmp.le.s32.totalorder 2, %s11
      // Predicated region
      $region93: #{prediction_network_forward.1} parent=5 // pred_check
        %p756 = pneg %p755
      $region94: #{prediction_network_forward.1} parent=5 // pred_check_branch
        %758 = sbr.rel (%p756) target = $region96
      $region95: #{prediction_network_forward.1} parent=5 // pred_region
        %s759 = ssub.s32 %s11, 2
        // Predicated region
        $region97: #{prediction_network_forward.1} parent=95 // pred_check
          %p760 = pneg %p150
        $region98: #{prediction_network_forward.1} parent=95 // pred_check_branch
          %762 = sbr.rel (%p760) target = $region100
        $region99: #{prediction_network_forward.1} parent=95 // pred_region
          %s763 = sand.u32 %s135, 1
          %s764 = sand.u32 %s135, 1
          %s765 = smul.addr %s764, 56
          %s766 = scalar_lea.vmem [#allocation2], %s765
        $region100: #{prediction_network_forward.1} parent=95 // pred_fallthru
          _
      $region96: #{prediction_network_forward.1} parent=5 // pred_fallthru
        _
    $region6: #{prediction_network_forward.1} parent=1 // loop_footer
      %s15 = sadd.s32 1, %s11
    $region7: #{prediction_network_forward.1} parent=1 // loop_footer_branch
      %10 = sbr.rel target = $region3
    $region8: #{prediction_network_forward.1} parent=1 // loop_exit
      _

</llo_original>
